<compile_context>
chip_gen: v7x
topology: tpu7x:2x2x1
jax: 0.10.0
libtpu: 0.0.40
codegen_flags: <defaults>
</compile_context>

<pallas_src>
import functools
import math

import jax
import jax.numpy as jnp
from jax.experimental import pallas as pl
from jax.experimental.pallas import tpu as pltpu


def _round_up(v, m):
    return ((v + m - 1) // m) * m


# ---------------------------------------------------------------------------
# Hardware-aware VMEM budgeting.
# ---------------------------------------------------------------------------
def _hw_params():
    """Return (physical VMEM bytes per core, #TensorCores per chip)."""
    kind = ""
    try:
        kind = jax.devices()[0].device_kind.lower()
    except Exception:
        kind = ""
    is_v7 = ("v7" in kind) or ("7x" in kind)
    vmem = None
    try:
        info = pltpu.get_tpu_info()
        vmem = int(getattr(info, "vmem_capacity_bytes", 0)) or None
    except Exception:
        vmem = None
    if vmem is None:
        vmem = (64 << 20) if is_v7 else (128 << 20)
    n_tc = 2 if is_v7 else 1
    return vmem, n_tc


_VMEM_BYTES, _NUM_TC = _hw_params()
# Explicit scoped-VMEM limit for every pallas_call (default scoped limit is only
# 16/32 MiB).  Keep comfortable headroom below physical capacity:
#   v5e/v6e (128 MiB physical) -> 96 MiB, v7x (64 MiB physical) -> 48 MiB.
_VMEM_LIMIT = int(min(_VMEM_BYTES * 3 // 4, 96 << 20))
# Byte budget for ONE grid step: double-buffered input + output blocks plus the
# full-tile f32 temporaries the kernel body creates.  60% of the scoped limit
# leaves slack for compiler scratch / extra temporaries.
_TILE_BUDGET = int(_VMEM_LIMIT * 6 // 10)


def _cparams(dim_sem):
    return pltpu.CompilerParams(
        dimension_semantics=dim_sem,
        vmem_limit_bytes=_VMEM_LIMIT,
    )


# ---------------------------------------------------------------------------
# channels_last, plain path: 2-D slab (rows, C), normalize over the lane axis.
# Used when C is a multiple of 128 (already lane-dense) or when the packed
# path does not apply (e.g. row count not divisible by the pack factor).
# ---------------------------------------------------------------------------
def _ln_rows_kernel(x_ref, w_ref, b_ref, o_ref, *, eps):
    x = x_ref[...]                                    # (TM, C)
    if x.dtype != jnp.float32:
        x = x.astype(jnp.float32)
    # Drop x right after forming xc: only xc + (TM,1) stats stay live.
    xc = x - jnp.mean(x, axis=-1, keepdims=True)
    inv = jax.lax.rsqrt(jnp.mean(xc * xc, axis=-1, keepdims=True) + eps)
    w = w_ref[...].astype(jnp.float32)                # (1, C)
    b = b_ref[...].astype(jnp.float32)
    o_ref[...] = (xc * inv * w + b).astype(o_ref.dtype)


def _pick_tile_rows(rows, row_elems, itemsize, n_f32_tmps, reserved_bytes=0):
    """Largest row tile (multiple of 8) within the per-step VMEM byte budget."""
    budget = max(1, _TILE_BUDGET - reserved_bytes)
    # 2x double-buffered input + 2x double-buffered output (input dtype)
    # + n full-tile f32 temporaries.
    per_row = row_elems * (4 * itemsize + n_f32_tmps * 4)
    tr = budget // max(1, per_row)
    tr = max(8, (tr // 8) * 8)
    # Split the row loop across TensorCores only on chips that have >1 TC and
    # only when each half still gets a reasonable amount of work.
    if _NUM_TC > 1 and rows * row_elems * itemsize >= (2 << 20):
        tr = min(tr, _round_up(pl.cdiv(rows, _NUM_TC), 8))
    if tr >= rows:
        return rows            # full-extent block is always a legal block size
    return tr


def _layernorm_rows_plain(x2d, weight, bias, eps):
    rows, C = x2d.shape
    itemsize = jnp.dtype(x2d.dtype).itemsize
    n_tmp = 3 if itemsize == 4 else 4        # sub-32-bit inputs add an f32 upcast
    tile_rows = _pick_tile_rows(rows, C, itemsize, n_tmp)
    grid = (pl.cdiv(rows, tile_rows),)

    w2d = weight.astype(jnp.float32).reshape(1, C)
    b2d = bias.astype(jnp.float32).reshape(1, C)

    kernel = functools.partial(_ln_rows_kernel, eps=eps)
    return pl.pallas_call(
        kernel,
        out_shape=jax.ShapeDtypeStruct((rows, C), x2d.dtype),
        grid_spec=pltpu.PrefetchScalarGridSpec(
            num_scalar_prefetch=0,
            grid=grid,
            in_specs=[
                pl.BlockSpec((tile_rows, C), lambda i: (i, 0)),
                pl.BlockSpec((1, C), lambda i: (0, 0)),
                pl.BlockSpec((1, C), lambda i: (0, 0)),
            ],
            out_specs=pl.BlockSpec((tile_rows, C), lambda i: (i, 0)),
        ),
        compiler_params=_cparams(("parallel",)),
    )(x2d, w2d, b2d)


# ---------------------------------------------------------------------------
# channels_last, lane-dense packed path for C not a multiple of 128.
#
# View (rows, C) as (rows/k, k*C) with k*C a multiple of 128 (pure reshape,
# row-major).  Per-row mean/var becomes a segmented reduction within aligned
# C-lane groups, implemented as a matmul with a block-diagonal averaging
# matrix M (M[i,j] = 1/C iff i,j in the same segment).  The matmul also
# broadcasts the result back to every lane of the segment, so everything
# (loads, stores, elementwise) stays unmasked and lane-dense.  The MXU is
# otherwise idle in this mem-bound kernel, so the matmuls are ~free.
# ---------------------------------------------------------------------------
def _ln_packed_kernel(x_ref, m_ref, w_ref, b_ref, o_ref, *, eps):
    x = x_ref[...]                                    # (TM, KC)
    if x.dtype != jnp.float32:
        x = x.astype(jnp.float32)
    mseg = m_ref[...]                                 # (KC, KC) block-diag 1/C
    xc = x - jnp.dot(x, mseg, preferred_element_type=jnp.float32)
    var = jnp.dot(xc * xc, mseg, preferred_element_type=jnp.float32)
    inv = jax.lax.rsqrt(var + eps)
    w = w_ref[...]                                    # (1, KC) f32
    b = b_ref[...]
    o_ref[...] = (xc * inv * w + b).astype(o_ref.dtype)


def _layernorm_rows_packed(x2d, weight, bias, eps, k, kc):
    rows, C = x2d.shape
    prows = rows // k
    xp = x2d.reshape(prows, kc)                       # pure reshape, no movement
    itemsize = jnp.dtype(x2d.dtype).itemsize

    # Block-diagonal segmented-averaging matrix and lane-packed weight/bias.
    seg = jnp.full((C, C), 1.0 / C, dtype=jnp.float32)
    mseg = jnp.kron(jnp.eye(k, dtype=jnp.float32), seg)            # (kc, kc)
    w_p = jnp.tile(weight.astype(jnp.float32), (k,)).reshape(1, kc)
    b_p = jnp.tile(bias.astype(jnp.float32), (k,)).reshape(1, kc)

    n_tmp = 4 if itemsize == 4 else 5                 # mean/var are full-tile here
    reserved = 2 * kc * kc * 4                        # M's (double) buffers
    tile_rows = _pick_tile_rows(prows, kc, itemsize, n_tmp, reserved_bytes=reserved)
    grid = (pl.cdiv(prows, tile_rows),)

    kernel = functools.partial(_ln_packed_kernel, eps=eps)
    out = pl.pallas_call(
        kernel,
        out_shape=jax.ShapeDtypeStruct((prows, kc), x2d.dtype),
        grid_spec=pltpu.PrefetchScalarGridSpec(
            num_scalar_prefetch=0,
            grid=grid,
            in_specs=[
                pl.BlockSpec((tile_rows, kc), lambda i: (i, 0)),
                pl.BlockSpec((kc, kc), lambda i: (0, 0)),
                pl.BlockSpec((1, kc), lambda i: (0, 0)),
                pl.BlockSpec((1, kc), lambda i: (0, 0)),
            ],
            out_specs=pl.BlockSpec((tile_rows, kc), lambda i: (i, 0)),
        ),
        compiler_params=_cparams(("parallel",)),
    )(xp, mseg, w_p, b_p)
    return out.reshape(rows, C)


def _layernorm_rows(x2d, weight, bias, eps):
    rows, C = x2d.shape
    if C % 128 != 0:
        g = math.gcd(C, 128)
        k = 128 // g
        kc = C * k                                    # lcm(C, 128)
        # Packed path only when the averaging matrix stays small and the row
        # count packs evenly.
        # TODO(synk): handle rows % k != 0 by running the remainder rows
        # through the plain kernel instead of falling back entirely.
        if kc <= 512 and rows % k == 0 and rows // k >= 1:
            return _layernorm_rows_packed(x2d, weight, bias, eps, k, kc)
    return _layernorm_rows_plain(x2d, weight, bias, eps)


# ---------------------------------------------------------------------------
# channels_first: native NCHW kernel, (TN, C, TILE_HW) blocks, reduce over C
# (sublane axis); H*W sits on the 128-lane axis -> lane-dense stores, no
# transposes in the wrapper.  TN>1 batches several images per block when
# C*H*W is small (late ConvNeXt stages) so the grid doesn't degenerate into
# N tiny steps.
# ---------------------------------------------------------------------------
def _ln_nchw_kernel(x_ref, w_ref, b_ref, o_ref, *, eps):
    x = x_ref[...]                                    # (TN, C, T)
    if x.dtype != jnp.float32:
        x = x.astype(jnp.float32)
    xc = x - jnp.mean(x, axis=1, keepdims=True)       # reduce over C (sublanes)
    inv = jax.lax.rsqrt(jnp.mean(xc * xc, axis=1, keepdims=True) + eps)
    w = w_ref[...].astype(jnp.float32)                # (1, C, 1)
    b = b_ref[...].astype(jnp.float32)
    o_ref[...] = (xc * inv * w + b).astype(o_ref.dtype)


def _layernorm_nchw(x, weight, bias, eps):
    N, C, H, W = x.shape
    hw = H * W
    x3d = x.reshape(N, C, hw)                         # pure reshape, no transpose
    itemsize = jnp.dtype(x.dtype).itemsize

    n_tmp = 3 if itemsize == 4 else 4
    per_elem = 4 * itemsize + n_tmp * 4
    budget_elems = max(1, _TILE_BUDGET // per_elem)

    if C * hw <= budget_elems:
        tile_hw = hw
        tn = max(1, min(N, budget_elems // (C * hw)))
    else:
        tn = 1
        t = (budget_elems // max(1, C) // 128) * 128
        tile_hw = min(hw, max(128, t))

    # Keep >=2 grid steps only on chips with >1 TensorCore and enough work.
    if _NUM_TC > 1 and N * C * hw * itemsize >= (2 << 20):
        steps = pl.cdiv(N, tn) * pl.cdiv(hw, tile_hw)
        if steps < _NUM_TC:
            if N >= _NUM_TC:
                tn = pl.cdiv(N, _NUM_TC)
            elif hw > 128:
                tile_hw = min(hw, max(128, _round_up(pl.cdiv(hw, _NUM_TC), 128)))

    grid = (pl.cdiv(N, tn), pl.cdiv(hw, tile_hw))

    w3d = weight.astype(jnp.float32).reshape(1, C, 1)
    b3d = bias.astype(jnp.float32).reshape(1, C, 1)

    kernel = functools.partial(_ln_nchw_kernel, eps=eps)
    out = pl.pallas_call(
        kernel,
        out_shape=jax.ShapeDtypeStruct((N, C, hw), x.dtype),
        grid_spec=pltpu.PrefetchScalarGridSpec(
            num_scalar_prefetch=0,
            grid=grid,
            in_specs=[
                pl.BlockSpec((tn, C, tile_hw), lambda n, j: (n, 0, j)),
                pl.BlockSpec((1, C, 1), lambda n, j: (0, 0, 0)),
                pl.BlockSpec((1, C, 1), lambda n, j: (0, 0, 0)),
            ],
            out_specs=pl.BlockSpec((tn, C, tile_hw), lambda n, j: (n, 0, j)),
        ),
        compiler_params=_cparams(("parallel", "parallel")),
    )(x3d, w3d, b3d)
    return out.reshape(N, C, H, W)


# ---------------------------------------------------------------------------
# Public forward (mirrors the PyTorch module).
# ---------------------------------------------------------------------------
def layer_norm(x, weight, bias, eps=1e-6, data_format="channels_last"):
    if data_format not in ("channels_last", "channels_first"):
        raise ValueError(f"not support data format '{data_format}'")

    if data_format == "channels_last":
        C = x.shape[-1]
        lead = x.shape[:-1]
        y = _layernorm_rows(x.reshape(-1, C), weight, bias, eps)
        return y.reshape(*lead, C)
    else:
        return _layernorm_nchw(x, weight, bias, eps)


def _reference(x, weight, bias, eps, data_format):
    """Pure-JAX reference matching the PyTorch forward exactly."""
    if data_format == "channels_last":
        mean = jnp.mean(x, axis=-1, keepdims=True)
        var = jnp.mean((x - mean) ** 2, axis=-1, keepdims=True)
        return (x - mean) / jnp.sqrt(var + eps) * weight + bias
    else:
        mean = jnp.mean(x, axis=1, keepdims=True)
        var = jnp.mean((x - mean) ** 2, axis=1, keepdims=True)
        xn = (x - mean) / jnp.sqrt(var + eps)
        return weight[:, None, None] * xn + bias[:, None, None]


if __name__ == "__main__":
    key = jax.random.PRNGKey(0)
    eps = 1e-6
    C = 4

    # Parameters exactly as in nn.Module.__init__: ones / zeros.
    weight = jnp.ones((C,), dtype=jnp.float32)
    bias = jnp.zeros((C,), dtype=jnp.float32)

    k1, k2, k3, k4 = jax.random.split(key, 4)

    # channels_first (NCHW), as used in the ConvNeXt backbone downsample layers.
    x_cf = jax.random.normal(k1, (2, C, 16, 16), dtype=jnp.float32)
    y_cf = jax.block_until_ready(
        layer_norm(x_cf, weight, bias, eps, data_format="channels_first"))
    ref_cf = _reference(x_cf, weight, bias, eps, "channels_first")
    assert y_cf.shape == x_cf.shape
    assert jnp.allclose(y_cf, ref_cf, atol=1e-5, rtol=1e-5)

    # channels_last (NHWC), C=4 -> lane-dense packed path (k=32, kc=128).
    x_cl = jax.random.normal(k2, (2, 16, 16, C), dtype=jnp.float32)
    y_cl = jax.block_until_ready(
        layer_norm(x_cl, weight, bias, eps, data_format="channels_last"))
    ref_cl = _reference(x_cl, weight, bias, eps, "channels_last")
    assert y_cl.shape == x_cl.shape
    assert jnp.allclose(y_cl, ref_cl, atol=1e-5, rtol=1e-5)

    # channels_last with a row count not divisible by the pack factor
    # (3*7*6 = 126 rows): exercises the plain pad-free partial-block path.
    x_rg = jax.random.normal(k3, (3, 7, 6, C), dtype=jnp.float32)
    y_rg = jax.block_until_ready(
        layer_norm(x_rg, weight, bias, eps, data_format="channels_last"))
    ref_rg = _reference(x_rg, weight, bias, eps, "channels_last")
    assert y_rg.shape == x_rg.shape
    assert jnp.allclose(y_rg, ref_rg, atol=1e-5, rtol=1e-5)

    # channels_last, ConvNeXt-like C=96 in bf16 -> packed MXU path (kc=384).
    C2 = 96
    w2 = 1.0 + 0.1 * jax.random.normal(k4, (C2,), dtype=jnp.float32)
    b2 = 0.1 * jnp.ones((C2,), dtype=jnp.float32)
    x96 = jax.random.normal(jax.random.PRNGKey(7), (2, 8, 8, C2), dtype=jnp.bfloat16)
    y96 = jax.block_until_ready(
        layer_norm(x96, w2, b2, eps, data_format="channels_last"))
    ref96 = _reference(x96.astype(jnp.float32), w2, b2, eps, "channels_last")
    assert y96.shape == x96.shape
    assert jnp.allclose(y96.astype(jnp.float32), ref96, atol=5e-2, rtol=5e-2)

    print("KERNEL_OK")
</pallas_src>

<mosaic_0001>
module attributes {stable_mosaic.version = 11 : i64} {
  func.func @_ln_nchw_kernel(%arg0: i32, %arg1: i32, %arg2: memref<2x4x256xf32, #tpu.memory_space<vmem>>, %arg3: memref<1x4x1xf32, #tpu.memory_space<vmem>>, %arg4: memref<1x4x1xf32, #tpu.memory_space<vmem>>, %arg5: memref<2x4x256xf32, #tpu.memory_space<vmem>>) attributes {dimension_semantics = [#tpu.dimension_semantics<parallel>, #tpu.dimension_semantics<parallel>], iteration_bounds = array<i64: 1, 1>, scalar_prefetch = 0 : i64, scratch_operands = 0 : i64, tpu.core_type = #tpu.core_type<tc>, window_params = [{transform_indices = @transform_0, window_bounds = array<i64: 2, 4, 256>}, {pipeline_mode = #tpu.pipeline_mode<synchronous>, transform_indices = @transform_1, window_bounds = array<i64: 1, 4, 1>}, {pipeline_mode = #tpu.pipeline_mode<synchronous>, transform_indices = @transform_2, window_bounds = array<i64: 1, 4, 1>}, {transform_indices = @transform_3, window_bounds = array<i64: 2, 4, 256>}]} {
    %c0 = arith.constant 0 : index
    %c0_0 = arith.constant 0 : index
    %c0_1 = arith.constant 0 : index
    %0 = vector.load %arg2[%c0, %c0_0, %c0_1] : memref<2x4x256xf32, #tpu.memory_space<vmem>>, vector<2x4x256xf32>
    %cst = arith.constant dense<0.000000e+00> : vector<2x256xf32>
    %1 = vector.multi_reduction <add>, %0, %cst [1] : vector<2x4x256xf32> to vector<2x256xf32>
    %2 = vector.shape_cast %1 : vector<2x256xf32> to vector<2x1x256xf32>
    %cst_2 = arith.constant 4.000000e+00 : f32
    %3 = vector.broadcast %cst_2 : f32 to vector<2x1x256xf32>
    %4 = arith.divf %2, %3 : vector<2x1x256xf32>
    %5 = vector.broadcast %4 : vector<2x1x256xf32> to vector<2x4x256xf32>
    %6 = arith.subf %0, %5 : vector<2x4x256xf32>
    %7 = arith.mulf %6, %6 : vector<2x4x256xf32>
    %cst_3 = arith.constant dense<0.000000e+00> : vector<2x256xf32>
    %8 = vector.multi_reduction <add>, %7, %cst_3 [1] : vector<2x4x256xf32> to vector<2x256xf32>
    %9 = vector.shape_cast %8 : vector<2x256xf32> to vector<2x1x256xf32>
    %cst_4 = arith.constant 4.000000e+00 : f32
    %10 = vector.broadcast %cst_4 : f32 to vector<2x1x256xf32>
    %11 = arith.divf %9, %10 : vector<2x1x256xf32>
    %cst_5 = arith.constant 9.99999997E-7 : f32
    %12 = vector.broadcast %cst_5 : f32 to vector<2x1x256xf32>
    %13 = arith.addf %11, %12 : vector<2x1x256xf32>
    %14 = math.rsqrt %13 : vector<2x1x256xf32>
    %c0_6 = arith.constant 0 : index
    %c0_7 = arith.constant 0 : index
    %c0_8 = arith.constant 0 : index
    %15 = vector.load %arg3[%c0_6, %c0_7, %c0_8] : memref<1x4x1xf32, #tpu.memory_space<vmem>>, vector<1x4x1xf32>
    %c0_9 = arith.constant 0 : index
    %c0_10 = arith.constant 0 : index
    %c0_11 = arith.constant 0 : index
    %16 = vector.load %arg4[%c0_9, %c0_10, %c0_11] : memref<1x4x1xf32, #tpu.memory_space<vmem>>, vector<1x4x1xf32>
    %17 = vector.broadcast %14 : vector<2x1x256xf32> to vector<2x4x256xf32>
    %18 = arith.mulf %6, %17 : vector<2x4x256xf32>
    %19 = vector.broadcast %15 : vector<1x4x1xf32> to vector<2x4x256xf32>
    %20 = arith.mulf %18, %19 : vector<2x4x256xf32>
    %21 = vector.broadcast %16 : vector<1x4x1xf32> to vector<2x4x256xf32>
    %22 = arith.addf %20, %21 : vector<2x4x256xf32>
    %c0_12 = arith.constant 0 : index
    %c0_13 = arith.constant 0 : index
    %c0_14 = arith.constant 0 : index
    %23 = vector.load %arg5[%c0_12, %c0_13, %c0_14] : memref<2x4x256xf32, #tpu.memory_space<vmem>>, vector<2x4x256xf32>
    tpu.vector_store %arg5[%c0_12, %c0_13, %c0_14], %22 {strides = array<i32>} : memref<2x4x256xf32, #tpu.memory_space<vmem>>, vector<2x4x256xf32>,
    return
  }
  func.func @transform_0(%arg0: i32, %arg1: i32) -> (i32, i32, i32) {
    %c0_i32 = arith.constant 0 : i32
    %c0_i32_0 = arith.constant 0 : i32
    return %arg0, %c0_i32, %arg1 : i32, i32, i32
  }
  func.func @transform_1(%arg0: i32, %arg1: i32) -> (i32, i32, i32) {
    %c0_i32 = arith.constant 0 : i32
    %c0_i32_0 = arith.constant 0 : i32
    %c0_i32_1 = arith.constant 0 : i32
    %c0_i32_2 = arith.constant 0 : i32
    return %c0_i32, %c0_i32_0, %c0_i32_1 : i32, i32, i32
  }
  func.func @transform_2(%arg0: i32, %arg1: i32) -> (i32, i32, i32) {
    %c0_i32 = arith.constant 0 : i32
    %c0_i32_0 = arith.constant 0 : i32
    %c0_i32_1 = arith.constant 0 : i32
    %c0_i32_2 = arith.constant 0 : i32
    return %c0_i32, %c0_i32_0, %c0_i32_1 : i32, i32, i32
  }
  func.func @transform_3(%arg0: i32, %arg1: i32) -> (i32, i32, i32) {
    %c0_i32 = arith.constant 0 : i32
    %c0_i32_0 = arith.constant 0 : i32
    return %arg0, %c0_i32, %arg1 : i32, i32, i32
  }
}

</mosaic_0001>

<llo_original>
// kernel: tpu_custom_call.1
$region0: #{tpu_custom_call.1}
  #allocation0 [shape = 'u32[]', space=smem, size = 0x4, offset = 0x4, fixed_abs, tag = 'smem constant byte address 0x4 - core index']
  #allocation1 [shape = 'u32[144,128]{1,0:T(1,128)}', space=vmem, size = 0x12000, scoped, tag = 'internal scratch']
  %s0 = inlined_call_operand.hbm [shape: f32[2,4,256], index: 0, kind: input, shape index: {}]
  %s1 = inlined_call_operand.hbm [shape: f32[1,4,1], index: 1, kind: input, shape index: {}]
  %s2 = inlined_call_operand.hbm [shape: f32[1,4,1], index: 2, kind: input, shape index: {}]
  %s3 = inlined_call_operand.hbm [shape: f32[2,4,256], index: 3, kind: output, shape index: {}]
  %s4 = sld [smem:[#allocation0]]
  $region34: #{tpu_custom_call.1} parent=0
    _
  %s6 = ssub.s32 1, %s4
  %s7 = scalar_select 0, %s6, %s4
  $region1: #{tpu_custom_call.1} parent=0
    #allocation2 [shape = 'u8[8192]{0}', space=vmem, size = 0x2000, scoped, tag = 'input window, operand 0, single buffered']
    #allocation3 [shape = 's32[1]{0}', space=sflag, size = 0x4, scoped, tag = 'scoped memory for tpu_custom_call.1']
    #allocation4 [shape = 's32[1]{0}', space=sflag, size = 0x4, scoped, tag = 'scoped memory for tpu_custom_call.1']
    #allocation5 [shape = 'u8[2048]{0}', space=vmem, size = 0x800, scoped, tag = 'input window, operand 1, single buffered']
    #allocation6 [shape = 's32[1]{0}', space=sflag, size = 0x4, scoped, tag = 'scoped memory for tpu_custom_call.1']
    #allocation7 [shape = 'u8[2048]{0}', space=vmem, size = 0x800, scoped, tag = 'input window, operand 2, single buffered']
    #allocation8 [shape = 'u8[8192]{0}', space=vmem, size = 0x2000, scoped, tag = 'output window, operand 0, single buffered']
    %8 = vsyncpa [#allocation3], 0
    %9 = vsyncpa [#allocation6], 0
    %10 = vsyncpa [#allocation4], 0
    // Predicated region
    $region2: #{tpu_custom_call.1} parent=1 // pred_check
      _
    $region3: #{tpu_custom_call.1} parent=1 // pred_check_branch
      %12 = sbr.rel (0) target = $region5
    $region4: #{tpu_custom_call.1} parent=1 // pred_region
      %s14 = ssub.s32 256, 256
      %15 = vsyncadd [#allocation3], %s14
      %s16 = sshll.u32 [#allocation2], 4
      %s17 = int_to_ptr.vmem [resolvable:$true] %s16
      %22 = dma.hbm_to_vmem [thread:$0]  %s0, 256, %s17, [#allocation3], 128, 128, 8
    $region5: #{tpu_custom_call.1} parent=1 // pred_fallthru
      _
    // Predicated region
    $region6: #{tpu_custom_call.1} parent=1 // pred_check
      _
    $region7: #{tpu_custom_call.1} parent=1 // pred_check_branch
      %24 = sbr.rel (0) target = $region9
    $region8: #{tpu_custom_call.1} parent=1 // pred_region
      %s26 = ssub.s32 64, 64
      %27 = vsyncadd [#allocation6], %s26
      %s29 = sshll.u32 [#allocation5], 4
      %s30 = int_to_ptr.vmem [resolvable:$true] %s29
      %32 = dma.hbm_to_vmem [thread:$0]  %s1, 64, %s30, [#allocation6]
    $region9: #{tpu_custom_call.1} parent=1 // pred_fallthru
      _
    // Predicated region
    $region10: #{tpu_custom_call.1} parent=1 // pred_check
      _
    $region11: #{tpu_custom_call.1} parent=1 // pred_check_branch
      %34 = sbr.rel (0) target = $region13
    $region12: #{tpu_custom_call.1} parent=1 // pred_region
      %s36 = ssub.s32 64, 64
      %37 = vsyncadd [#allocation6], %s36
      %s39 = sshll.u32 [#allocation7], 4
      %s40 = int_to_ptr.vmem [resolvable:$true] %s39
      %42 = dma.hbm_to_vmem [thread:$0]  %s2, 64, %s40, [#allocation6]
    $region13: #{tpu_custom_call.1} parent=1 // pred_fallthru
      _
    // Predicated region
    $region14: #{tpu_custom_call.1} parent=1 // pred_check
      _
    $region15: #{tpu_custom_call.1} parent=1 // pred_check_branch
      %44 = sbr.rel (0) target = $region17
    $region16: #{tpu_custom_call.1} parent=1 // pred_region
      %45 = dma.done [#allocation3], 256
    $region17: #{tpu_custom_call.1} parent=1 // pred_fallthru
      _
    // Predicated region
    $region18: #{tpu_custom_call.1} parent=1 // pred_check
      _
    $region19: #{tpu_custom_call.1} parent=1 // pred_check_branch
      %47 = sbr.rel (0) target = $region21
    $region20: #{tpu_custom_call.1} parent=1 // pred_region
      %48 = dma.done [#allocation6], 64
    $region21: #{tpu_custom_call.1} parent=1 // pred_fallthru
      _
    // Predicated region
    $region22: #{tpu_custom_call.1} parent=1 // pred_check
      _
    $region23: #{tpu_custom_call.1} parent=1 // pred_check_branch
      %50 = sbr.rel (0) target = $region25
    $region24: #{tpu_custom_call.1} parent=1 // pred_region
      %51 = dma.done [#allocation6], 64
    $region25: #{tpu_custom_call.1} parent=1 // pred_fallthru
      _
    %v52 = vld [vmem:[#allocation2] sm:$0xff]
    %v53 = vld [vmem:[#allocation2 + $0x8] sm:$0xff]
    %v56 = vcombine.high %v52, %v52
    %v57 = vcombine.high %v53, %v53
    %vm60 = vcmask 1043456
    %v61 = vsel %vm60, %v52, 0.0
    %v62 = vrot.slane %v61, 4
    %v63 = vadd.f32 %v61, %v62
    %v64 = vrot.slane %v63, 2
    %v65 = vadd.f32 %v63, %v64
    %v66 = vrot.slane %v65, 1
    %v67 = vadd.f32 %v65, %v66
    %v68 = vsel %vm60, %v56, 0.0
    %v69 = vrot.slane %v68, 4
    %v70 = vadd.f32 %v68, %v69
    %v71 = vrot.slane %v70, 2
    %v72 = vadd.f32 %v70, %v71
    %v73 = vrot.slane %v72, 1
    %v74 = vadd.f32 %v72, %v73
    %v75 = vsel %vm60, %v53, 0.0
    %v76 = vrot.slane %v75, 4
    %v77 = vadd.f32 %v75, %v76
    %v78 = vrot.slane %v77, 2
    %v79 = vadd.f32 %v77, %v78
    %v80 = vrot.slane %v79, 1
    %v81 = vadd.f32 %v79, %v80
    %v82 = vsel %vm60, %v57, 0.0
    %v83 = vrot.slane %v82, 4
    %v84 = vadd.f32 %v82, %v83
    %v85 = vrot.slane %v84, 2
    %v86 = vadd.f32 %v84, %v85
    %v87 = vrot.slane %v86, 1
    %v88 = vadd.f32 %v86, %v87
    %v89 = vrcp.pop 4.0
    %v90 = vmul.f32 %v67, %v89
    %v91 = vmul.f32 %v74, %v89
    %v92 = vmul.f32 %v81, %v89
    %v93 = vmul.f32 %v88, %v89
    %v98 = vcombine.low %v90, %v91
    %v99 = vcombine.low %v92, %v93
    %v102 = vsub.f32 %v52, %v98
    %v103 = vsub.f32 %v53, %v99
    %v104 = vmul.f32 %v102, %v102
    %v105 = vmul.f32 %v103, %v103
    %v108 = vcombine.high %v104, %v104
    %v109 = vcombine.high %v105, %v105
    %v112 = vsel %vm60, %v104, 0.0
    %v113 = vrot.slane %v112, 4
    %v114 = vadd.f32 %v112, %v113
    %v115 = vrot.slane %v114, 2
    %v116 = vadd.f32 %v114, %v115
    %v117 = vrot.slane %v116, 1
    %v118 = vadd.f32 %v116, %v117
    %v119 = vsel %vm60, %v108, 0.0
    %v120 = vrot.slane %v119, 4
    %v121 = vadd.f32 %v119, %v120
    %v122 = vrot.slane %v121, 2
    %v123 = vadd.f32 %v121, %v122
    %v124 = vrot.slane %v123, 1
    %v125 = vadd.f32 %v123, %v124
    %v126 = vsel %vm60, %v105, 0.0
    %v127 = vrot.slane %v126, 4
    %v128 = vadd.f32 %v126, %v127
    %v129 = vrot.slane %v128, 2
    %v130 = vadd.f32 %v128, %v129
    %v131 = vrot.slane %v130, 1
    %v132 = vadd.f32 %v130, %v131
    %v133 = vsel %vm60, %v109, 0.0
    %v134 = vrot.slane %v133, 4
    %v135 = vadd.f32 %v133, %v134
    %v136 = vrot.slane %v135, 2
    %v137 = vadd.f32 %v135, %v136
    %v138 = vrot.slane %v137, 1
    %v139 = vadd.f32 %v137, %v138
    %v140 = vmul.f32 %v118, %v89
    %v141 = vmul.f32 %v125, %v89
    %v142 = vmul.f32 %v132, %v89
    %v143 = vmul.f32 %v139, %v89
    %v144 = vadd.f32 %v140, 1e-06
    %v145 = vadd.f32 %v141, 1e-06
    %v146 = vadd.f32 %v142, 1e-06
    %v147 = vadd.f32 %v143, 1e-06
    %v148 = vrsqrt.pop %v144
    %v149 = vrsqrt.pop %v145
    %v150 = vrsqrt.pop %v146
    %v151 = vrsqrt.pop %v147
    %v152 = vld [vmem:[#allocation5] sm:$0xf]
    %v153 = vld [vmem:[#allocation7] sm:$0xf]
    %v158 = vcombine.low %v148, %v149
    %v159 = vcombine.low %v150, %v151
    %v162 = vmul.f32 %v102, %v158
    %v163 = vmul.f32 %v103, %v159
    %165 = vset.pattern.permute.xlu0 0
    %166 = vperm.xlu0 %165, %v152
    %v167 = vpop.permute.xlu0 %166
    %v169 = vunpack.c.l.s4 839922192
    %v170 = vunpack.c.0.s8 %v169
    %v171 = vlaneseq
    %v172 = vshrl.u32 %v171, 7
    %v173 = vsub.s32 %v170, %v172
    %v174 = vrot.slane %v167, %v173
    %v176 = vmul.f32 %v162, %v174
    %v177 = vmul.f32 %v163, %v174
    %179 = vset.pattern.permute.xlu0 0
    %180 = vperm.xlu0 %179, %v153
    %v181 = vpop.permute.xlu0 %180
    %v183 = vunpack.c.l.s4 839922192
    %v184 = vunpack.c.0.s8 %v183
    %v185 = vlaneseq
    %v186 = vshrl.u32 %v185, 7
    %v187 = vsub.s32 %v184, %v186
    %v188 = vrot.slane %v181, %v187
    %v190 = vadd.f32 %v176, %v188
    %v191 = vadd.f32 %v177, %v188
    %192 = vst [vmem:[#allocation8] sm:$0xff] %v190
    %193 = vst [vmem:[#allocation8 + $0x8] sm:$0xff] %v191
    // Predicated region
    $region26: #{tpu_custom_call.1} parent=1 // pred_check
      _
    $region27: #{tpu_custom_call.1} parent=1 // pred_check_branch
      %195 = sbr.rel (0) target = $region29
    $region28: #{tpu_custom_call.1} parent=1 // pred_region
      %s197 = ssub.s32 256, 256
      %198 = vsyncadd [#allocation4], %s197
      %s199 = sshll.u32 [#allocation8], 4
      %s200 = int_to_ptr.vmem [resolvable:$true] %s199
      %205 = dma.vmem_to_hbm [thread:$0]  %s200, 256, %s3, [#allocation4], 128, 128, 8
    $region29: #{tpu_custom_call.1} parent=1 // pred_fallthru
      _
    // Predicated region
    $region30: #{tpu_custom_call.1} parent=1 // pred_check
      _
    $region31: #{tpu_custom_call.1} parent=1 // pred_check_branch
      %207 = sbr.rel (0) target = $region33
    $region32: #{tpu_custom_call.1} parent=1 // pred_region
      %208 = dma.done [#allocation4], 256
    $region33: #{tpu_custom_call.1} parent=1 // pred_fallthru
      _
    %209 = vsyncpa [#allocation3], 1
    %210 = vsyncpa [#allocation6], 1
    %211 = vsyncpa [#allocation4], 1

</llo_original>
